<compile_context>
chip_gen: v7x
topology: tpu7x:2x2x1
jax: 0.10.0
libtpu: 0.0.40
codegen_flags: <defaults>
</compile_context>

<pallas_src>
import numpy as np
import jax
import jax.numpy as jnp
from jax.experimental import pallas as pl
from jax.experimental.pallas import tpu as pltpu


K = 8  # depthwise kernel size used by every conv block


# --------------------------------- kernel ----------------------------------

def _make_kernel(B, C, l1, l2, offs):
    """Build the fused CNNEEG forward kernel (one invocation, whole batch)."""

    def kernel(xtaps_ref, pack_ref, gather_ref, pw2w_ref, out_ref):
        pack = pack_ref[...]                                    # (R, 128)

        def row(name, k=0, width=128):
            r = offs[name] + k
            return pack[r:r + 1, :width]                        # (1, width)

        # conv1: depthwise k=8 s=2 p=3 (tap-major over wrapper-built slices),
        # then pointwise C -> 128 as one (B*l1, C) @ (C, 128) matmul.
        acc = xtaps_ref[0] * row("dw1_w", 0, C)                 # (B*l1, C)
        for k in range(1, K):
            acc = acc + xtaps_ref[k] * row("dw1_w", k, C)
        h = acc + row("dw1_b", 0, C)
        h = jnp.dot(h, pack[offs["pw1_w"]:offs["pw1_w"] + C, :],
                    preferred_element_type=jnp.float32) + row("pw1_b")   # (B*l1, 128)

        # conv2: depthwise k=8 s=4 p=4.  The strided/padded window gather is a
        # constant 0/1 matmul (MXU), then 8 tap-major FMAs; pointwise 128 -> 64.
        gathered = jnp.dot(gather_ref[...], h,
                           preferred_element_type=jnp.float32)  # (K*B*l2, 128)
        n = B * l2
        acc = gathered[0:n, :] * row("dw2_w", 0)
        for k in range(1, K):
            acc = acc + gathered[k * n:(k + 1) * n, :] * row("dw2_w", k)
        h = acc + row("dw2_b")                                  # (B*l2, 128)
        h = jnp.dot(h, pw2w_ref[...],
                    preferred_element_type=jnp.float32) + row("pw2_b", 0, 64)  # (B*l2, 64)

        # conv3: depthwise k=8 s=10 p=0 -> exactly one output position / batch.
        w3 = pack[offs["dw3_w"]:offs["dw3_w"] + K, :64]         # (8, 64)
        rows = [jnp.sum(h[b * l2:b * l2 + K, :] * w3, axis=0, keepdims=True)
                for b in range(B)]
        h = jnp.concatenate(rows, axis=0) + row("dw3_b", 0, 64)  # (B, 64)

        # fused (pointwise 64 -> C) @ (fc C -> 1), then sigmoid.
        logit = (jnp.sum(h * row("fcf_w", 0, 64), axis=1, keepdims=True)
                 + row("fcf_b", 0, 1))                           # (B, 1)
        out_ref[...] = 1.0 / (1.0 + jnp.exp(-logit))

    return kernel


# -------------------------------- wrapper ----------------------------------

def cnneeg_forward(x_ncl, params):
    """x_ncl: (B, C, L) float32 (PyTorch NCL).  Returns (B, 1) sigmoid output."""
    B, C, L = x_ncl.shape
    l1 = (L + 2 * 3 - K) // 2 + 1          # conv1: k=8 s=2 p=3
    l2 = (l1 + 2 * 4 - K) // 4 + 1         # conv2: k=8 s=4 p=4
    l3 = (l2 - K) // 10 + 1                # conv3: k=8 s=10 p=0
    assert l3 == 1 and l2 >= K, "conv stack must reduce length to 1 for fc(C, 1)"

    f32 = jnp.float32
    x = jnp.transpose(x_ncl, (0, 2, 1)).astype(f32)              # (B, L, C)
    x_pad = jnp.pad(x, ((0, 0), (3, 3), (0, 0)))                 # (B, L+6, C)

    # conv1 tap slices (pure gather, stride 2): tap k holds rows k, k+2, ...
    x_taps = jnp.stack(
        [x_pad[:, k:k + 2 * (l1 - 1) + 1:2, :].reshape(B * l1, C)
         for k in range(K)], axis=0)                             # (K, B*l1, C)

    # conv2 strided-window gather as a constant 0/1 matrix (applied on MXU):
    #   gathered[k*B*l2 + b*l2 + t, :] = h1[b*l1 + (4t + k - 4), :]  (0 if OOB)
    G = np.zeros((K * B * l2, B * l1), np.float32)
    for k in range(K):
        for b in range(B):
            for t in range(l2):
                j = 4 * t + k - 4
                if 0 <= j < l1:
                    G[k * B * l2 + b * l2 + t, b * l1 + j] = 1.0
    G = jnp.asarray(G)

    # Fuse pointwise-3 (64 -> C) with fc (C -> 1): exact, no nonlinearity between.
    fcf_w = (params["pw3_w"] @ params["fc_w"]).reshape(1, -1)    # (1, 64)
    fcf_b = params["pw3_b"] @ params["fc_w"] + params["fc_b"]    # (1, 1)

    # Pack all small parameters into a single (R, 128) array (one DMA).
    entries = [
        ("dw1_w", params["dw1_w"]), ("dw2_w", params["dw2_w"]),
        ("dw3_w", params["dw3_w"]), ("pw1_w", params["pw1_w"]),
        ("dw1_b", params["dw1_b"]), ("pw1_b", params["pw1_b"]),
        ("dw2_b", params["dw2_b"]), ("pw2_b", params["pw2_b"]),
        ("dw3_b", params["dw3_b"]), ("fcf_w", fcf_w), ("fcf_b", fcf_b),
    ]
    offs, r = {}, 0
    for name, arr in entries:
        offs[name] = r
        r += arr.shape[0]
    R = ((r + 7) // 8) * 8
    pack = jnp.zeros((R, 128), f32)
    for name, arr in entries:
        o = offs[name]
        pack = pack.at[o:o + arr.shape[0], :arr.shape[1]].set(arr.astype(f32))

    pw2_w = params["pw2_w"].astype(f32)

    out = pl.pallas_call(
        _make_kernel(B, C, l1, l2, offs),
        out_shape=jax.ShapeDtypeStruct((B, 1), f32),
        grid=(1,),
        in_specs=[
            pl.BlockSpec((K, B * l1, C), lambda i: (0, 0, 0)),
            pl.BlockSpec((R, 128), lambda i: (0, 0)),
            pl.BlockSpec((K * B * l2, B * l1), lambda i: (0, 0)),
            pl.BlockSpec((128, 64), lambda i: (0, 0)),
        ],
        out_specs=pl.BlockSpec((B, 1), lambda i: (0, 0)),
        compiler_params=pltpu.CompilerParams(
            dimension_semantics=("arbitrary",)),
    )(x_taps, pack, G, pw2_w)
    return out


# ----------------------- deterministic parameter init ----------------------

def init_params(input_channel, key):
    C = input_channel
    shapes = {
        "dw1_w": (8, C),    "dw1_b": (1, C),
        "pw1_w": (C, 128),  "pw1_b": (1, 128),
        "dw2_w": (8, 128),  "dw2_b": (1, 128),
        "pw2_w": (128, 64), "pw2_b": (1, 64),
        "dw3_w": (8, 64),   "dw3_b": (1, 64),
        "pw3_w": (64, C),   "pw3_b": (1, C),
        "fc_w":  (C, 1),    "fc_b":  (1, 1),
    }
    keys = jax.random.split(key, len(shapes))
    return {name: 0.1 * jax.random.normal(k, shp, dtype=jnp.float32)
            for k, (name, shp) in zip(keys, shapes.items())}


# ------------------------ pure-JAX reference (check) ------------------------

def ref_forward(x_ncl, params):
    def conv1d(x, w, b, stride, pad, groups):
        out = jax.lax.conv_general_dilated(
            x, w, window_strides=(stride,), padding=[(pad, pad)],
            dimension_numbers=("NCH", "OIH", "NCH"),
            feature_group_count=groups)
        return out + b[None, :, None]

    C = x_ncl.shape[1]
    dw1 = jnp.transpose(params["dw1_w"])[:, None, :]   # (C, 1, 8)
    pw1 = jnp.transpose(params["pw1_w"])[:, :, None]   # (128, C, 1)
    dw2 = jnp.transpose(params["dw2_w"])[:, None, :]
    pw2 = jnp.transpose(params["pw2_w"])[:, :, None]
    dw3 = jnp.transpose(params["dw3_w"])[:, None, :]
    pw3 = jnp.transpose(params["pw3_w"])[:, :, None]

    h = conv1d(x_ncl, dw1, params["dw1_b"][0], 2, 3, C)
    h = conv1d(h, pw1, params["pw1_b"][0], 1, 0, 1)
    h = conv1d(h, dw2, params["dw2_b"][0], 4, 4, 128)
    h = conv1d(h, pw2, params["pw2_b"][0], 1, 0, 1)
    h = conv1d(h, dw3, params["dw3_b"][0], 10, 0, 64)
    h = conv1d(h, pw3, params["pw3_b"][0], 1, 0, 1)
    flat = h.reshape(h.shape[0], -1)
    logit = flat @ params["fc_w"] + params["fc_b"]
    return jax.nn.sigmoid(logit)


# ----------------------------------- main -----------------------------------

if __name__ == "__main__":
    # input_channel=4, seq length 56: 56 -> 28 -> 8 -> 1, so Flatten() yields
    # exactly `input_channel` features as required by nn.Linear(C, 1).
    B, C, L = 2, 4, 56
    key = jax.random.PRNGKey(0)
    kx, kp = jax.random.split(key)
    x = jax.random.normal(kx, (B, C, L), dtype=jnp.float32)
    params = init_params(C, kp)

    out = jax.block_until_ready(cnneeg_forward(x, params))
    assert out.shape == (B, 1)

    ref = jax.block_until_ready(ref_forward(x, params))
    np.testing.assert_allclose(np.asarray(out), np.asarray(ref),
                               rtol=1e-4, atol=1e-5)
    print("KERNEL_OK")
</pallas_src>

<mosaic_0001>
module attributes {stable_mosaic.version = 11 : i64} {
  func.func @kernel(%arg0: i32, %arg1: memref<8x56x4xf32, #tpu.memory_space<vmem>>, %arg2: memref<40x128xf32, #tpu.memory_space<vmem>>, %arg3: memref<128x56xf32, #tpu.memory_space<vmem>>, %arg4: memref<128x64xf32, #tpu.memory_space<vmem>>, %arg5: memref<2x1xf32, #tpu.memory_space<vmem>>) attributes {dimension_semantics = [#tpu.dimension_semantics<arbitrary>], iteration_bounds = array<i64: 1>, scalar_prefetch = 0 : i64, scratch_operands = 0 : i64, tpu.core_type = #tpu.core_type<tc>, window_params = [{pipeline_mode = #tpu.pipeline_mode<synchronous>, transform_indices = @transform_0, window_bounds = array<i64: 8, 56, 4>}, {pipeline_mode = #tpu.pipeline_mode<synchronous>, transform_indices = @transform_1, window_bounds = array<i64: 40, 128>}, {pipeline_mode = #tpu.pipeline_mode<synchronous>, transform_indices = @transform_2, window_bounds = array<i64: 128, 56>}, {pipeline_mode = #tpu.pipeline_mode<synchronous>, transform_indices = @transform_3, window_bounds = array<i64: 128, 64>}, {pipeline_mode = #tpu.pipeline_mode<synchronous>, transform_indices = @transform_4, window_bounds = array<i64: 2, 1>}]} {
    %c0 = arith.constant 0 : index
    %c0_0 = arith.constant 0 : index
    %0 = vector.load %arg2[%c0, %c0_0] : memref<40x128xf32, #tpu.memory_space<vmem>>, vector<40x128xf32>
    %c0_1 = arith.constant 0 : index
    %c0_2 = arith.constant 0 : index
    %c0_3 = arith.constant 0 : index
    %1 = vector.load %arg1[%c0_1, %c0_2, %c0_3] : memref<8x56x4xf32, #tpu.memory_space<vmem>>, vector<1x56x4xf32>
    %2 = vector.shape_cast %1 : vector<1x56x4xf32> to vector<56x4xf32>
    %3 = vector.extract_strided_slice %0 {offsets = [0, 0], sizes = [1, 4], strides = [1, 1]} : vector<40x128xf32> to vector<1x4xf32>
    %4 = vector.broadcast %3 : vector<1x4xf32> to vector<56x4xf32>
    %5 = arith.mulf %2, %4 : vector<56x4xf32>
    %c1 = arith.constant 1 : index
    %c0_4 = arith.constant 0 : index
    %c0_5 = arith.constant 0 : index
    %6 = vector.load %arg1[%c1, %c0_4, %c0_5] : memref<8x56x4xf32, #tpu.memory_space<vmem>>, vector<1x56x4xf32>
    %7 = vector.shape_cast %6 : vector<1x56x4xf32> to vector<56x4xf32>
    %8 = vector.extract_strided_slice %0 {offsets = [1, 0], sizes = [1, 4], strides = [1, 1]} : vector<40x128xf32> to vector<1x4xf32>
    %9 = vector.broadcast %8 : vector<1x4xf32> to vector<56x4xf32>
    %10 = arith.mulf %7, %9 : vector<56x4xf32>
    %11 = arith.addf %5, %10 : vector<56x4xf32>
    %c2 = arith.constant 2 : index
    %c0_6 = arith.constant 0 : index
    %c0_7 = arith.constant 0 : index
    %12 = vector.load %arg1[%c2, %c0_6, %c0_7] : memref<8x56x4xf32, #tpu.memory_space<vmem>>, vector<1x56x4xf32>
    %13 = vector.shape_cast %12 : vector<1x56x4xf32> to vector<56x4xf32>
    %14 = vector.extract_strided_slice %0 {offsets = [2, 0], sizes = [1, 4], strides = [1, 1]} : vector<40x128xf32> to vector<1x4xf32>
    %15 = vector.broadcast %14 : vector<1x4xf32> to vector<56x4xf32>
    %16 = arith.mulf %13, %15 : vector<56x4xf32>
    %17 = arith.addf %11, %16 : vector<56x4xf32>
    %c3 = arith.constant 3 : index
    %c0_8 = arith.constant 0 : index
    %c0_9 = arith.constant 0 : index
    %18 = vector.load %arg1[%c3, %c0_8, %c0_9] : memref<8x56x4xf32, #tpu.memory_space<vmem>>, vector<1x56x4xf32>
    %19 = vector.shape_cast %18 : vector<1x56x4xf32> to vector<56x4xf32>
    %20 = vector.extract_strided_slice %0 {offsets = [3, 0], sizes = [1, 4], strides = [1, 1]} : vector<40x128xf32> to vector<1x4xf32>
    %21 = vector.broadcast %20 : vector<1x4xf32> to vector<56x4xf32>
    %22 = arith.mulf %19, %21 : vector<56x4xf32>
    %23 = arith.addf %17, %22 : vector<56x4xf32>
    %c4 = arith.constant 4 : index
    %c0_10 = arith.constant 0 : index
    %c0_11 = arith.constant 0 : index
    %24 = vector.load %arg1[%c4, %c0_10, %c0_11] : memref<8x56x4xf32, #tpu.memory_space<vmem>>, vector<1x56x4xf32>
    %25 = vector.shape_cast %24 : vector<1x56x4xf32> to vector<56x4xf32>
    %26 = vector.extract_strided_slice %0 {offsets = [4, 0], sizes = [1, 4], strides = [1, 1]} : vector<40x128xf32> to vector<1x4xf32>
    %27 = vector.broadcast %26 : vector<1x4xf32> to vector<56x4xf32>
    %28 = arith.mulf %25, %27 : vector<56x4xf32>
    %29 = arith.addf %23, %28 : vector<56x4xf32>
    %c5 = arith.constant 5 : index
    %c0_12 = arith.constant 0 : index
    %c0_13 = arith.constant 0 : index
    %30 = vector.load %arg1[%c5, %c0_12, %c0_13] : memref<8x56x4xf32, #tpu.memory_space<vmem>>, vector<1x56x4xf32>
    %31 = vector.shape_cast %30 : vector<1x56x4xf32> to vector<56x4xf32>
    %32 = vector.extract_strided_slice %0 {offsets = [5, 0], sizes = [1, 4], strides = [1, 1]} : vector<40x128xf32> to vector<1x4xf32>
    %33 = vector.broadcast %32 : vector<1x4xf32> to vector<56x4xf32>
    %34 = arith.mulf %31, %33 : vector<56x4xf32>
    %35 = arith.addf %29, %34 : vector<56x4xf32>
    %c6 = arith.constant 6 : index
    %c0_14 = arith.constant 0 : index
    %c0_15 = arith.constant 0 : index
    %36 = vector.load %arg1[%c6, %c0_14, %c0_15] : memref<8x56x4xf32, #tpu.memory_space<vmem>>, vector<1x56x4xf32>
    %37 = vector.shape_cast %36 : vector<1x56x4xf32> to vector<56x4xf32>
    %38 = vector.extract_strided_slice %0 {offsets = [6, 0], sizes = [1, 4], strides = [1, 1]} : vector<40x128xf32> to vector<1x4xf32>
    %39 = vector.broadcast %38 : vector<1x4xf32> to vector<56x4xf32>
    %40 = arith.mulf %37, %39 : vector<56x4xf32>
    %41 = arith.addf %35, %40 : vector<56x4xf32>
    %c7 = arith.constant 7 : index
    %c0_16 = arith.constant 0 : index
    %c0_17 = arith.constant 0 : index
    %42 = vector.load %arg1[%c7, %c0_16, %c0_17] : memref<8x56x4xf32, #tpu.memory_space<vmem>>, vector<1x56x4xf32>
    %43 = vector.shape_cast %42 : vector<1x56x4xf32> to vector<56x4xf32>
    %44 = vector.extract_strided_slice %0 {offsets = [7, 0], sizes = [1, 4], strides = [1, 1]} : vector<40x128xf32> to vector<1x4xf32>
    %45 = vector.broadcast %44 : vector<1x4xf32> to vector<56x4xf32>
    %46 = arith.mulf %43, %45 : vector<56x4xf32>
    %47 = arith.addf %41, %46 : vector<56x4xf32>
    %48 = vector.extract_strided_slice %0 {offsets = [28, 0], sizes = [1, 4], strides = [1, 1]} : vector<40x128xf32> to vector<1x4xf32>
    %49 = vector.broadcast %48 : vector<1x4xf32> to vector<56x4xf32>
    %50 = arith.addf %47, %49 : vector<56x4xf32>
    %51 = vector.extract_strided_slice %0 {offsets = [24, 0], sizes = [4, 128], strides = [1, 1]} : vector<40x128xf32> to vector<4x128xf32>
    %cst = arith.constant dense<0.000000e+00> : vector<56x128xf32>
    %52 = tpu.matmul %50, %51, %cst {dimension_numbers = #tpu.dot_dimension_numbers<[1], [0], [0], [1], [0, 0, 1, 1], [], []>} : vector<56x4xf32>, vector<4x128xf32>, vector<56x128xf32> -> vector<56x128xf32>
    %53 = vector.extract_strided_slice %0 {offsets = [29, 0], sizes = [1, 128], strides = [1, 1]} : vector<40x128xf32> to vector<1x128xf32>
    %54 = vector.broadcast %53 : vector<1x128xf32> to vector<56x128xf32>
    %55 = arith.addf %52, %54 : vector<56x128xf32>
    %c0_18 = arith.constant 0 : index
    %c0_19 = arith.constant 0 : index
    %56 = vector.load %arg3[%c0_18, %c0_19] : memref<128x56xf32, #tpu.memory_space<vmem>>, vector<128x56xf32>
    %cst_20 = arith.constant dense<0.000000e+00> : vector<128x128xf32>
    %57 = tpu.matmul %56, %55, %cst_20 {dimension_numbers = #tpu.dot_dimension_numbers<[1], [0], [0], [1], [0, 0, 1, 1], [], []>} : vector<128x56xf32>, vector<56x128xf32>, vector<128x128xf32> -> vector<128x128xf32>
    %58 = vector.extract_strided_slice %57 {offsets = [0, 0], sizes = [16, 128], strides = [1, 1]} : vector<128x128xf32> to vector<16x128xf32>
    %59 = vector.extract_strided_slice %0 {offsets = [8, 0], sizes = [1, 128], strides = [1, 1]} : vector<40x128xf32> to vector<1x128xf32>
    %60 = vector.broadcast %59 : vector<1x128xf32> to vector<16x128xf32>
    %61 = arith.mulf %58, %60 : vector<16x128xf32>
    %62 = vector.extract_strided_slice %57 {offsets = [16, 0], sizes = [16, 128], strides = [1, 1]} : vector<128x128xf32> to vector<16x128xf32>
    %63 = vector.extract_strided_slice %0 {offsets = [9, 0], sizes = [1, 128], strides = [1, 1]} : vector<40x128xf32> to vector<1x128xf32>
    %64 = vector.broadcast %63 : vector<1x128xf32> to vector<16x128xf32>
    %65 = arith.mulf %62, %64 : vector<16x128xf32>
    %66 = arith.addf %61, %65 : vector<16x128xf32>
    %67 = vector.extract_strided_slice %57 {offsets = [32, 0], sizes = [16, 128], strides = [1, 1]} : vector<128x128xf32> to vector<16x128xf32>
    %68 = vector.extract_strided_slice %0 {offsets = [10, 0], sizes = [1, 128], strides = [1, 1]} : vector<40x128xf32> to vector<1x128xf32>
    %69 = vector.broadcast %68 : vector<1x128xf32> to vector<16x128xf32>
    %70 = arith.mulf %67, %69 : vector<16x128xf32>
    %71 = arith.addf %66, %70 : vector<16x128xf32>
    %72 = vector.extract_strided_slice %57 {offsets = [48, 0], sizes = [16, 128], strides = [1, 1]} : vector<128x128xf32> to vector<16x128xf32>
    %73 = vector.extract_strided_slice %0 {offsets = [11, 0], sizes = [1, 128], strides = [1, 1]} : vector<40x128xf32> to vector<1x128xf32>
    %74 = vector.broadcast %73 : vector<1x128xf32> to vector<16x128xf32>
    %75 = arith.mulf %72, %74 : vector<16x128xf32>
    %76 = arith.addf %71, %75 : vector<16x128xf32>
    %77 = vector.extract_strided_slice %57 {offsets = [64, 0], sizes = [16, 128], strides = [1, 1]} : vector<128x128xf32> to vector<16x128xf32>
    %78 = vector.extract_strided_slice %0 {offsets = [12, 0], sizes = [1, 128], strides = [1, 1]} : vector<40x128xf32> to vector<1x128xf32>
    %79 = vector.broadcast %78 : vector<1x128xf32> to vector<16x128xf32>
    %80 = arith.mulf %77, %79 : vector<16x128xf32>
    %81 = arith.addf %76, %80 : vector<16x128xf32>
    %82 = vector.extract_strided_slice %57 {offsets = [80, 0], sizes = [16, 128], strides = [1, 1]} : vector<128x128xf32> to vector<16x128xf32>
    %83 = vector.extract_strided_slice %0 {offsets = [13, 0], sizes = [1, 128], strides = [1, 1]} : vector<40x128xf32> to vector<1x128xf32>
    %84 = vector.broadcast %83 : vector<1x128xf32> to vector<16x128xf32>
    %85 = arith.mulf %82, %84 : vector<16x128xf32>
    %86 = arith.addf %81, %85 : vector<16x128xf32>
    %87 = vector.extract_strided_slice %57 {offsets = [96, 0], sizes = [16, 128], strides = [1, 1]} : vector<128x128xf32> to vector<16x128xf32>
    %88 = vector.extract_strided_slice %0 {offsets = [14, 0], sizes = [1, 128], strides = [1, 1]} : vector<40x128xf32> to vector<1x128xf32>
    %89 = vector.broadcast %88 : vector<1x128xf32> to vector<16x128xf32>
    %90 = arith.mulf %87, %89 : vector<16x128xf32>
    %91 = arith.addf %86, %90 : vector<16x128xf32>
    %92 = vector.extract_strided_slice %57 {offsets = [112, 0], sizes = [16, 128], strides = [1, 1]} : vector<128x128xf32> to vector<16x128xf32>
    %93 = vector.extract_strided_slice %0 {offsets = [15, 0], sizes = [1, 128], strides = [1, 1]} : vector<40x128xf32> to vector<1x128xf32>
    %94 = vector.broadcast %93 : vector<1x128xf32> to vector<16x128xf32>
    %95 = arith.mulf %92, %94 : vector<16x128xf32>
    %96 = arith.addf %91, %95 : vector<16x128xf32>
    %97 = vector.extract_strided_slice %0 {offsets = [30, 0], sizes = [1, 128], strides = [1, 1]} : vector<40x128xf32> to vector<1x128xf32>
    %98 = vector.broadcast %97 : vector<1x128xf32> to vector<16x128xf32>
    %99 = arith.addf %96, %98 : vector<16x128xf32>
    %c0_21 = arith.constant 0 : index
    %c0_22 = arith.constant 0 : index
    %100 = vector.load %arg4[%c0_21, %c0_22] : memref<128x64xf32, #tpu.memory_space<vmem>>, vector<128x64xf32>
    %cst_23 = arith.constant dense<0.000000e+00> : vector<16x64xf32>
    %101 = tpu.matmul %99, %100, %cst_23 {dimension_numbers = #tpu.dot_dimension_numbers<[1], [0], [0], [1], [0, 0, 1, 1], [], []>} : vector<16x128xf32>, vector<128x64xf32>, vector<16x64xf32> -> vector<16x64xf32>
    %102 = vector.extract_strided_slice %0 {offsets = [31, 0], sizes = [1, 64], strides = [1, 1]} : vector<40x128xf32> to vector<1x64xf32>
    %103 = vector.broadcast %102 : vector<1x64xf32> to vector<16x64xf32>
    %104 = arith.addf %101, %103 : vector<16x64xf32>
    %105 = vector.extract_strided_slice %0 {offsets = [16, 0], sizes = [8, 64], strides = [1, 1]} : vector<40x128xf32> to vector<8x64xf32>
    %106 = vector.extract_strided_slice %104 {offsets = [0, 0], sizes = [8, 64], strides = [1, 1]} : vector<16x64xf32> to vector<8x64xf32>
    %107 = arith.mulf %106, %105 : vector<8x64xf32>
    %cst_24 = arith.constant dense<0.000000e+00> : vector<64xf32>
    %108 = vector.multi_reduction <add>, %107, %cst_24 [0] : vector<8x64xf32> to vector<64xf32>
    %109 = vector.shape_cast %108 : vector<64xf32> to vector<1x64xf32>
    %110 = vector.extract_strided_slice %104 {offsets = [8, 0], sizes = [8, 64], strides = [1, 1]} : vector<16x64xf32> to vector<8x64xf32>
    %111 = arith.mulf %110, %105 : vector<8x64xf32>
    %cst_25 = arith.constant dense<0.000000e+00> : vector<64xf32>
    %112 = vector.multi_reduction <add>, %111, %cst_25 [0] : vector<8x64xf32> to vector<64xf32>
    %113 = vector.shape_cast %112 : vector<64xf32> to vector<1x64xf32>
    %114 = tpu.concatenate %109, %113 in 0 : vector<1x64xf32>, vector<1x64xf32> -> vector<2x64xf32>
    %115 = vector.extract_strided_slice %0 {offsets = [32, 0], sizes = [1, 64], strides = [1, 1]} : vector<40x128xf32> to vector<1x64xf32>
    %116 = vector.broadcast %115 : vector<1x64xf32> to vector<2x64xf32>
    %117 = arith.addf %114, %116 : vector<2x64xf32>
    %118 = vector.extract_strided_slice %0 {offsets = [33, 0], sizes = [1, 64], strides = [1, 1]} : vector<40x128xf32> to vector<1x64xf32>
    %119 = vector.broadcast %118 : vector<1x64xf32> to vector<2x64xf32>
    %120 = arith.mulf %117, %119 : vector<2x64xf32>
    %cst_26 = arith.constant dense<0.000000e+00> : vector<2xf32>
    %121 = vector.multi_reduction <add>, %120, %cst_26 [1] : vector<2x64xf32> to vector<2xf32>
    %122 = vector.shape_cast %121 : vector<2xf32> to vector<2x1xf32>
    %123 = vector.extract_strided_slice %0 {offsets = [34, 0], sizes = [1, 1], strides = [1, 1]} : vector<40x128xf32> to vector<1x1xf32>
    %124 = vector.broadcast %123 : vector<1x1xf32> to vector<2x1xf32>
    %125 = arith.addf %122, %124 : vector<2x1xf32>
    %cst_27 = arith.constant 0.000000e+00 : f32
    %126 = vector.broadcast %cst_27 : f32 to vector<2x1xf32>
    %127 = arith.subf %126, %125 : vector<2x1xf32>
    %128 = math.exp %127 : vector<2x1xf32>
    %cst_28 = arith.constant 1.000000e+00 : f32
    %129 = vector.broadcast %cst_28 : f32 to vector<2x1xf32>
    %130 = arith.addf %129, %128 : vector<2x1xf32>
    %cst_29 = arith.constant 1.000000e+00 : f32
    %131 = vector.broadcast %cst_29 : f32 to vector<2x1xf32>
    %132 = arith.divf %131, %130 : vector<2x1xf32>
    %c0_30 = arith.constant 0 : index
    %c0_31 = arith.constant 0 : index
    %133 = vector.load %arg5[%c0_30, %c0_31] : memref<2x1xf32, #tpu.memory_space<vmem>>, vector<2x1xf32>
    tpu.vector_store %arg5[%c0_30, %c0_31], %132 {strides = array<i32>} : memref<2x1xf32, #tpu.memory_space<vmem>>, vector<2x1xf32>,
    return
  }
  func.func @transform_0(%arg0: i32) -> (i32, i32, i32) {
    %c0_i32 = arith.constant 0 : i32
    %c0_i32_0 = arith.constant 0 : i32
    %c0_i32_1 = arith.constant 0 : i32
    %c0_i32_2 = arith.constant 0 : i32
    return %c0_i32, %c0_i32_0, %c0_i32_1 : i32, i32, i32
  }
  func.func @transform_1(%arg0: i32) -> (i32, i32) {
    %c0_i32 = arith.constant 0 : i32
    %c0_i32_0 = arith.constant 0 : i32
    %c0_i32_1 = arith.constant 0 : i32
    return %c0_i32, %c0_i32_0 : i32, i32
  }
  func.func @transform_2(%arg0: i32) -> (i32, i32) {
    %c0_i32 = arith.constant 0 : i32
    %c0_i32_0 = arith.constant 0 : i32
    %c0_i32_1 = arith.constant 0 : i32
    return %c0_i32, %c0_i32_0 : i32, i32
  }
  func.func @transform_3(%arg0: i32) -> (i32, i32) {
    %c0_i32 = arith.constant 0 : i32
    %c0_i32_0 = arith.constant 0 : i32
    %c0_i32_1 = arith.constant 0 : i32
    return %c0_i32, %c0_i32_0 : i32, i32
  }
  func.func @transform_4(%arg0: i32) -> (i32, i32) {
    %c0_i32 = arith.constant 0 : i32
    %c0_i32_0 = arith.constant 0 : i32
    %c0_i32_1 = arith.constant 0 : i32
    return %c0_i32, %c0_i32_0 : i32, i32
  }
}

</mosaic_0001>

<llo_original>
// kernel: tpu_custom_call.1
$region0: #{tpu_custom_call.1}
  #allocation0 [shape = 'u32[]', space=smem, size = 0x4, offset = 0x4, fixed_abs, tag = 'smem constant byte address 0x4 - core index']
  #allocation1 [shape = 'u32[144,128]{1,0:T(1,128)}', space=vmem, size = 0x12000, scoped, tag = 'internal scratch']
  %s0 = inlined_call_operand.vmem [shape: f32[8,56,4], index: 0, kind: input, shape index: {}]
  %s1 = inlined_call_operand.vmem [shape: f32[40,128], index: 1, kind: input, shape index: {}]
  %s2 = inlined_call_operand.vmem [shape: f32[128,56], index: 2, kind: input, shape index: {}]
  %s3 = inlined_call_operand.vmem [shape: f32[128,64], index: 3, kind: input, shape index: {}]
  %s4 = inlined_call_operand.vmem [shape: f32[2,1], index: 4, kind: output, shape index: {}]
  %s5 = sld [smem:[#allocation0]]
  $region26: #{tpu_custom_call.1} parent=0
    _
  %s7 = ssub.s32 1, %s5
  %s8 = scalar_select 0, %s7, %s5
  // Predicated region
  $region2: #{tpu_custom_call.1} parent=0 // pred_check
    _
  $region3: #{tpu_custom_call.1} parent=0 // pred_check_branch
    %10 = sbr.rel (0) target = $region5
  $region4: #{tpu_custom_call.1} parent=0 // pred_region
    _
  $region5: #{tpu_custom_call.1} parent=0 // pred_fallthru
    _
  // Predicated region
  $region6: #{tpu_custom_call.1} parent=0 // pred_check
    _
  $region7: #{tpu_custom_call.1} parent=0 // pred_check_branch
    %12 = sbr.rel (0) target = $region9
  $region8: #{tpu_custom_call.1} parent=0 // pred_region
    _
  $region9: #{tpu_custom_call.1} parent=0 // pred_fallthru
    _
  // Predicated region
  $region10: #{tpu_custom_call.1} parent=0 // pred_check
    _
  $region11: #{tpu_custom_call.1} parent=0 // pred_check_branch
    %14 = sbr.rel (0) target = $region13
  $region12: #{tpu_custom_call.1} parent=0 // pred_region
    _
  $region13: #{tpu_custom_call.1} parent=0 // pred_fallthru
    _
  // Predicated region
  $region14: #{tpu_custom_call.1} parent=0 // pred_check
    _
  $region15: #{tpu_custom_call.1} parent=0 // pred_check_branch
    %16 = sbr.rel (0) target = $region17
  $region16: #{tpu_custom_call.1} parent=0 // pred_region
    _
  $region17: #{tpu_custom_call.1} parent=0 // pred_fallthru
    _
  %v17 = vld [vmem:[%s1] sm:$0xff]
  %v18 = vld [vmem:[%s1 + $0x8] sm:$0xff]
  %v19 = vld [vmem:[%s1 + $0x10] sm:$0xff]
  %v20 = vld [vmem:[%s1 + $0x18] sm:$0xff]
  %v21 = vld [vmem:[%s1 + $0x20] sm:$0xff]
  %v22 = vld [vmem:[%s0] sm:$0xff]
  %v23 = vld [vmem:[%s0 + $0x8] sm:$0xff]
  %v24 = vld [vmem:[%s0 + $0x10] sm:$0xff]
  %v25 = vld [vmem:[%s0 + $0x18] sm:$0xff]
  %v26 = vld [vmem:[%s0 + $0x20] sm:$0xff]
  %v27 = vld [vmem:[%s0 + $0x28] sm:$0xff]
  %v28 = vld [vmem:[%s0 + $0x30] sm:$0xff]
  %v29 = vlaneseq
  %v30 = vshrl.u32 %v29, 7
  %v31 = vsub.s32 0, %v30
  %v32 = vrot.slane %v17, %v31
  %v33 = vmul.f32 %v22, %v32
  %v34 = vmul.f32 %v23, %v32
  %v35 = vmul.f32 %v24, %v32
  %v36 = vmul.f32 %v25, %v32
  %v37 = vmul.f32 %v26, %v32
  %v38 = vmul.f32 %v27, %v32
  %v39 = vmul.f32 %v28, %v32
  %s40 = scalar_lea.vmem %s0, 56
  %v41 = vld [vmem:[%s40] sm:$0xff]
  %v42 = vld [vmem:[%s40 + $0x8] sm:$0xff]
  %v43 = vld [vmem:[%s40 + $0x10] sm:$0xff]
  %v44 = vld [vmem:[%s40 + $0x18] sm:$0xff]
  %v45 = vld [vmem:[%s40 + $0x20] sm:$0xff]
  %v46 = vld [vmem:[%s40 + $0x28] sm:$0xff]
  %v47 = vld [vmem:[%s40 + $0x30] sm:$0xff]
  %v48 = vlaneseq
  %v49 = vshrl.u32 %v48, 7
  %v50 = vsub.s32 1, %v49
  %v51 = vrot.slane %v17, %v50
  %v52 = vmul.f32 %v41, %v51
  %v53 = vmul.f32 %v42, %v51
  %v54 = vmul.f32 %v43, %v51
  %v55 = vmul.f32 %v44, %v51
  %v56 = vmul.f32 %v45, %v51
  %v57 = vmul.f32 %v46, %v51
  %v58 = vmul.f32 %v47, %v51
  %v59 = vadd.f32 %v33, %v52
  %v60 = vadd.f32 %v34, %v53
  %v61 = vadd.f32 %v35, %v54
  %v62 = vadd.f32 %v36, %v55
  %v63 = vadd.f32 %v37, %v56
  %v64 = vadd.f32 %v38, %v57
  %v65 = vadd.f32 %v39, %v58
  %s66 = scalar_lea.vmem %s0, 112
  %v67 = vld [vmem:[%s66] sm:$0xff]
  %v68 = vld [vmem:[%s66 + $0x8] sm:$0xff]
  %v69 = vld [vmem:[%s66 + $0x10] sm:$0xff]
  %v70 = vld [vmem:[%s66 + $0x18] sm:$0xff]
  %v71 = vld [vmem:[%s66 + $0x20] sm:$0xff]
  %v72 = vld [vmem:[%s66 + $0x28] sm:$0xff]
  %v73 = vld [vmem:[%s66 + $0x30] sm:$0xff]
  %v74 = vlaneseq
  %v75 = vshrl.u32 %v74, 7
  %v76 = vsub.s32 2, %v75
  %v77 = vrot.slane %v17, %v76
  %v78 = vmul.f32 %v67, %v77
  %v79 = vmul.f32 %v68, %v77
  %v80 = vmul.f32 %v69, %v77
  %v81 = vmul.f32 %v70, %v77
  %v82 = vmul.f32 %v71, %v77
  %v83 = vmul.f32 %v72, %v77
  %v84 = vmul.f32 %v73, %v77
  %v85 = vadd.f32 %v59, %v78
  %v86 = vadd.f32 %v60, %v79
  %v87 = vadd.f32 %v61, %v80
  %v88 = vadd.f32 %v62, %v81
  %v89 = vadd.f32 %v63, %v82
  %v90 = vadd.f32 %v64, %v83
  %v91 = vadd.f32 %v65, %v84
  %s92 = scalar_lea.vmem %s0, 168
  %v93 = vld [vmem:[%s92] sm:$0xff]
  %v94 = vld [vmem:[%s92 + $0x8] sm:$0xff]
  %v95 = vld [vmem:[%s92 + $0x10] sm:$0xff]
  %v96 = vld [vmem:[%s92 + $0x18] sm:$0xff]
  %v97 = vld [vmem:[%s92 + $0x20] sm:$0xff]
  %v98 = vld [vmem:[%s92 + $0x28] sm:$0xff]
  %v99 = vld [vmem:[%s92 + $0x30] sm:$0xff]
  %v100 = vlaneseq
  %v101 = vshrl.u32 %v100, 7
  %v102 = vsub.s32 3, %v101
  %v103 = vrot.slane %v17, %v102
  %v104 = vmul.f32 %v93, %v103
  %v105 = vmul.f32 %v94, %v103
  %v106 = vmul.f32 %v95, %v103
  %v107 = vmul.f32 %v96, %v103
  %v108 = vmul.f32 %v97, %v103
  %v109 = vmul.f32 %v98, %v103
  %v110 = vmul.f32 %v99, %v103
  %v111 = vadd.f32 %v85, %v104
  %v112 = vadd.f32 %v86, %v105
  %v113 = vadd.f32 %v87, %v106
  %v114 = vadd.f32 %v88, %v107
  %v115 = vadd.f32 %v89, %v108
  %v116 = vadd.f32 %v90, %v109
  %v117 = vadd.f32 %v91, %v110
  %s118 = scalar_lea.vmem %s0, 224
  %v119 = vld [vmem:[%s118] sm:$0xff]
  %v120 = vld [vmem:[%s118 + $0x8] sm:$0xff]
  %v121 = vld [vmem:[%s118 + $0x10] sm:$0xff]
  %v122 = vld [vmem:[%s118 + $0x18] sm:$0xff]
  %v123 = vld [vmem:[%s118 + $0x20] sm:$0xff]
  %v124 = vld [vmem:[%s118 + $0x28] sm:$0xff]
  %v125 = vld [vmem:[%s118 + $0x30] sm:$0xff]
  %v126 = vlaneseq
  %v127 = vshrl.u32 %v126, 7
  %v128 = vsub.s32 4, %v127
  %v129 = vrot.slane %v17, %v128
  %v130 = vmul.f32 %v119, %v129
  %v131 = vmul.f32 %v120, %v129
  %v132 = vmul.f32 %v121, %v129
  %v133 = vmul.f32 %v122, %v129
  %v134 = vmul.f32 %v123, %v129
  %v135 = vmul.f32 %v124, %v129
  %v136 = vmul.f32 %v125, %v129
  %v137 = vadd.f32 %v111, %v130
  %v138 = vadd.f32 %v112, %v131
  %v139 = vadd.f32 %v113, %v132
  %v140 = vadd.f32 %v114, %v133
  %v141 = vadd.f32 %v115, %v134
  %v142 = vadd.f32 %v116, %v135
  %v143 = vadd.f32 %v117, %v136
  %s144 = scalar_lea.vmem %s0, 280
  %v145 = vld [vmem:[%s144] sm:$0xff]
  %v146 = vld [vmem:[%s144 + $0x8] sm:$0xff]
  %v147 = vld [vmem:[%s144 + $0x10] sm:$0xff]
  %v148 = vld [vmem:[%s144 + $0x18] sm:$0xff]
  %v149 = vld [vmem:[%s144 + $0x20] sm:$0xff]
  %v150 = vld [vmem:[%s144 + $0x28] sm:$0xff]
  %v151 = vld [vmem:[%s144 + $0x30] sm:$0xff]
  %v152 = vlaneseq
  %v153 = vshrl.u32 %v152, 7
  %v154 = vsub.s32 5, %v153
  %v155 = vrot.slane %v17, %v154
  %v156 = vmul.f32 %v145, %v155
  %v157 = vmul.f32 %v146, %v155
  %v158 = vmul.f32 %v147, %v155
  %v159 = vmul.f32 %v148, %v155
  %v160 = vmul.f32 %v149, %v155
  %v161 = vmul.f32 %v150, %v155
  %v162 = vmul.f32 %v151, %v155
  %v163 = vadd.f32 %v137, %v156
  %v164 = vadd.f32 %v138, %v157
  %v165 = vadd.f32 %v139, %v158
  %v166 = vadd.f32 %v140, %v159
  %v167 = vadd.f32 %v141, %v160
  %v168 = vadd.f32 %v142, %v161
  %v169 = vadd.f32 %v143, %v162
  %s170 = scalar_lea.vmem %s0, 336
  %v171 = vld [vmem:[%s170] sm:$0xff]
  %v172 = vld [vmem:[%s170 + $0x8] sm:$0xff]
  %v173 = vld [vmem:[%s170 + $0x10] sm:$0xff]
  %v174 = vld [vmem:[%s170 + $0x18] sm:$0xff]
  %v175 = vld [vmem:[%s170 + $0x20] sm:$0xff]
  %v176 = vld [vmem:[%s170 + $0x28] sm:$0xff]
  %v177 = vld [vmem:[%s170 + $0x30] sm:$0xff]
  %v178 = vlaneseq
  %v179 = vshrl.u32 %v178, 7
  %v180 = vsub.s32 6, %v179
  %v181 = vrot.slane %v17, %v180
  %v182 = vmul.f32 %v171, %v181
  %v183 = vmul.f32 %v172, %v181
  %v184 = vmul.f32 %v173, %v181
  %v185 = vmul.f32 %v174, %v181
  %v186 = vmul.f32 %v175, %v181
  %v187 = vmul.f32 %v176, %v181
  %v188 = vmul.f32 %v177, %v181
  %v189 = vadd.f32 %v163, %v182
  %v190 = vadd.f32 %v164, %v183
  %v191 = vadd.f32 %v165, %v184
  %v192 = vadd.f32 %v166, %v185
  %v193 = vadd.f32 %v167, %v186
  %v194 = vadd.f32 %v168, %v187
  %v195 = vadd.f32 %v169, %v188
  %s196 = scalar_lea.vmem %s0, 392
  %v197 = vld [vmem:[%s196] sm:$0xff]
  %v198 = vld [vmem:[%s196 + $0x8] sm:$0xff]
  %v199 = vld [vmem:[%s196 + $0x10] sm:$0xff]
  %v200 = vld [vmem:[%s196 + $0x18] sm:$0xff]
  %v201 = vld [vmem:[%s196 + $0x20] sm:$0xff]
  %v202 = vld [vmem:[%s196 + $0x28] sm:$0xff]
  %v203 = vld [vmem:[%s196 + $0x30] sm:$0xff]
  %v204 = vlaneseq
  %v205 = vshrl.u32 %v204, 7
  %v206 = vsub.s32 7, %v205
  %v207 = vrot.slane %v17, %v206
  %v208 = vmul.f32 %v197, %v207
  %v209 = vmul.f32 %v198, %v207
  %v210 = vmul.f32 %v199, %v207
  %v211 = vmul.f32 %v200, %v207
  %v212 = vmul.f32 %v201, %v207
  %v213 = vmul.f32 %v202, %v207
  %v214 = vmul.f32 %v203, %v207
  %v215 = vadd.f32 %v189, %v208
  %v216 = vadd.f32 %v190, %v209
  %v217 = vadd.f32 %v191, %v210
  %v218 = vadd.f32 %v192, %v211
  %v219 = vadd.f32 %v193, %v212
  %v220 = vadd.f32 %v194, %v213
  %v221 = vadd.f32 %v195, %v214
  %v222 = vlaneseq
  %v223 = vshrl.u32 %v222, 7
  %v224 = vsub.s32 4, %v223
  %v225 = vrot.slane %v20, %v224
  %v226 = vadd.f32 %v215, %v225
  %v227 = vadd.f32 %v216, %v225
  %v228 = vadd.f32 %v217, %v225
  %v229 = vadd.f32 %v218, %v225
  %v230 = vadd.f32 %v219, %v225
  %v231 = vadd.f32 %v220, %v225
  %v232 = vadd.f32 %v221, %v225
  %v233 = vlaneseq
  %v234 = vshrl.u32 %v233, 7
  %v235 = vsub.s32 5, %v234
  %v236 = vrot.slane %v20, %v235
  %vm237 = vcmask 31744
  %v239 = vsel %vm237, %v226, 0
  %v242 = vsel %vm237, %v227, 0
  %v245 = vsel %vm237, %v228, 0
  %v248 = vsel %vm237, %v229, 0
  %v251 = vsel %vm237, %v230, 0
  %v254 = vsel %vm237, %v231, 0
  %v257 = vsel %vm237, %v232, 0
  %vm259 = vcmask 1043456
  %v261 = vsel %vm259, %v20, 0
  %263 = vmatprep.subr.mxu0 0.0
  %264 = vmatpush1.msra.mxu0 %v261
  %265 = vmatprep.subr.mxu0 0.0
  %266 = vmatpush1.msra.mxu0 0.0
  %267 = vmatprep.subr.mxu0 0.0
  %268 = vmatpush1.msra.mxu0 0.0
  %269 = vmatprep.subr.mxu0 0.0
  %270 = vmatpush1.msra.mxu0 0.0
  %271 = vmatprep.subr.mxu0 0.0
  %272 = vmatpush1.msra.mxu0 0.0
  %273 = vmatprep.subr.mxu0 0.0
  %274 = vmatpush1.msra.mxu0 0.0
  %275 = vmatprep.subr.mxu0 0.0
  %276 = vmatpush1.msra.mxu0 0.0
  %277 = vmatprep.subr.mxu0 0.0
  %278 = vmatpush1.msra.mxu0 0.0
  %279 = vmatprep.subr.mxu0 0.0
  %280 = vmatpush1.msra.mxu0 0.0
  %281 = vmatprep.subr.mxu0 0.0
  %282 = vmatpush1.msra.mxu0 0.0
  %283 = vmatprep.subr.mxu0 0.0
  %284 = vmatpush1.msra.mxu0 0.0
  %285 = vmatprep.subr.mxu0 0.0
  %286 = vmatpush1.msra.mxu0 0.0
  %287 = vmatprep.subr.mxu0 0.0
  %288 = vmatpush1.msra.mxu0 0.0
  %289 = vmatprep.subr.mxu0 0.0
  %290 = vmatpush1.msra.mxu0 0.0
  %291 = vmatprep.subr.mxu0 0.0
  %292 = vmatpush1.msra.mxu0 0.0
  %293 = vmatprep.subr.mxu0 0.0
  %294 = vmatpush1.msra.mxu0 0.0
  %295 = vmatprep.subr.mxu0 0.0
  %296 = vmatpush1.msra.mxu0 0.0
  %297 = vmatprep.subr.mxu0 0.0
  %298 = vmatpush1.msra.mxu0 0.0
  %299 = vmatprep.subr.mxu0 0.0
  %300 = vmatpush1.msra.mxu0 0.0
  %301 = vmatprep.subr.mxu0 0.0
  %302 = vmatpush1.msra.mxu0 0.0
  %303 = vmatprep.subr.mxu0 0.0
  %304 = vmatpush1.msra.mxu0 0.0
  %305 = vmatprep.subr.mxu0 0.0
  %306 = vmatpush1.msra.mxu0 0.0
  %307 = vmatprep.subr.mxu0 0.0
  %308 = vmatpush1.msra.mxu0 0.0
  %309 = vmatprep.subr.mxu0 0.0
  %310 = vmatpush1.msra.mxu0 0.0
  %311 = vmatprep.subr.mxu0 0.0
  %312 = vmatpush1.msra.mxu0 0.0
  %313 = vmatprep.subr.mxu0 0.0
  %314 = vmatpush1.msra.mxu0 0.0
  %315 = vmatprep.subr.mxu0 0.0
  %316 = vmatpush1.msra.mxu0 0.0
  %317 = vmatprep.subr.mxu0 0.0
  %318 = vmatpush1.msra.mxu0 0.0
  %319 = vmatprep.subr.mxu0 0.0
  %320 = vmatpush1.msra.mxu0 0.0
  %321 = vmatprep.subr.mxu0 0.0
  %322 = vmatpush1.msra.mxu0 0.0
  %323 = vmatprep.subr.mxu0 0.0
  %324 = vmatpush1.msra.mxu0 0.0
  %325 = vmatprep.subr.mxu0 0.0
  %326 = vmatpush1.msra.mxu0 0.0
  %327 = vmatprep.mubr.f32.mxu0 0.0
  %328 = vmatmul.mubr.f32.gmra.mrb[0].mxu0 %v239
  %v329 = vpop.f32.mrb[0].mxu0
  %v330 = vadd.f32 %v236, %v329
  %v331 = vpop.f32.mrb[0].mxu0
  %332 = vmatprep.mubr.f32.mxu0 0.0
  %333 = vmatmul.mubr.f32.gmra.mrb[0].mxu0 %v242
  %v334 = vpop.f32.mrb[0].mxu0
  %v335 = vadd.f32 %v236, %v334
  %v336 = vpop.f32.mrb[0].mxu0
  %337 = vmatprep.mubr.f32.mxu0 0.0
  %338 = vmatmul.mubr.f32.gmra.mrb[0].mxu0 %v245
  %v339 = vpop.f32.mrb[0].mxu0
  %v340 = vadd.f32 %v236, %v339
  %v341 = vpop.f32.mrb[0].mxu0
  %342 = vmatprep.mubr.f32.mxu0 0.0
  %343 = vmatmul.mubr.f32.gmra.mrb[0].mxu0 %v248
  %v344 = vpop.f32.mrb[0].mxu0
  %v345 = vadd.f32 %v236, %v344
  %v346 = vpop.f32.mrb[0].mxu0
  %347 = vmatprep.mubr.f32.mxu0 0.0
  %348 = vmatmul.mubr.f32.gmra.mrb[0].mxu0 %v251
  %v349 = vpop.f32.mrb[0].mxu0
  %v350 = vadd.f32 %v236, %v349
  %v351 = vpop.f32.mrb[0].mxu0
  %352 = vmatprep.mubr.f32.mxu0 0.0
  %353 = vmatmul.mubr.f32.gmra.mrb[0].mxu0 %v254
  %v354 = vpop.f32.mrb[0].mxu0
  %v355 = vadd.f32 %v236, %v354
  %v356 = vpop.f32.mrb[0].mxu0
  %357 = vmatprep.mubr.f32.mxu0 0.0
  %358 = vmatmul.mubr.f32.gmra.mrb[0].mxu0 %v257
  %v359 = vpop.f32.mrb[0].mxu0
  %v360 = vadd.f32 %v236, %v359
  %v361 = vpop.f32.mrb[0].mxu0
  %362 = vdwg.mxu0
  %v363 = vld [vmem:[%s2] sm:$0xff]
  %v364 = vld [vmem:[%s2 + $0x8] sm:$0xff]
  %v365 = vld [vmem:[%s2 + $0x10] sm:$0xff]
  %v366 = vld [vmem:[%s2 + $0x18] sm:$0xff]
  %v367 = vld [vmem:[%s2 + $0x20] sm:$0xff]
  %v368 = vld [vmem:[%s2 + $0x28] sm:$0xff]
  %v369 = vld [vmem:[%s2 + $0x30] sm:$0xff]
  %v370 = vld [vmem:[%s2 + $0x38] sm:$0xff]
  %v371 = vld [vmem:[%s2 + $0x40] sm:$0xff]
  %v372 = vld [vmem:[%s2 + $0x48] sm:$0xff]
  %v373 = vld [vmem:[%s2 + $0x50] sm:$0xff]
  %v374 = vld [vmem:[%s2 + $0x58] sm:$0xff]
  %v375 = vld [vmem:[%s2 + $0x60] sm:$0xff]
  %v376 = vld [vmem:[%s2 + $0x68] sm:$0xff]
  %v377 = vld [vmem:[%s2 + $0x70] sm:$0xff]
  %v378 = vld [vmem:[%s2 + $0x78] sm:$0xff]
  %vm379 = vcmask 457728
  %v381 = vsel %vm379, %v363, 0
  %v384 = vsel %vm379, %v364, 0
  %v387 = vsel %vm379, %v365, 0
  %v390 = vsel %vm379, %v366, 0
  %v393 = vsel %vm379, %v367, 0
  %v396 = vsel %vm379, %v368, 0
  %v399 = vsel %vm379, %v369, 0
  %v402 = vsel %vm379, %v370, 0
  %v405 = vsel %vm379, %v371, 0
  %v408 = vsel %vm379, %v372, 0
  %v411 = vsel %vm379, %v373, 0
  %v414 = vsel %vm379, %v374, 0
  %v417 = vsel %vm379, %v375, 0
  %v420 = vsel %vm379, %v376, 0
  %v423 = vsel %vm379, %v377, 0
  %v426 = vsel %vm379, %v378, 0
  %428 = vmatprep.subr.mxu0 0.0
  %429 = vmatpush1.msra.mxu0 %v330
  %430 = vmatprep.subr.mxu0 0.0
  %431 = vmatpush1.msra.mxu0 %v335
  %432 = vmatprep.subr.mxu0 0.0
  %433 = vmatpush1.msra.mxu0 %v340
  %434 = vmatprep.subr.mxu0 0.0
  %435 = vmatpush1.msra.mxu0 %v345
  %436 = vmatprep.subr.mxu0 0.0
  %437 = vmatpush1.msra.mxu0 %v350
  %438 = vmatprep.subr.mxu0 0.0
  %439 = vmatpush1.msra.mxu0 %v355
  %440 = vmatprep.subr.mxu0 0.0
  %441 = vmatpush1.msra.mxu0 %v360
  %442 = vmatprep.subr.mxu0 0.0
  %443 = vmatpush1.msra.mxu0 0.0
  %444 = vmatprep.subr.mxu0 0.0
  %445 = vmatpush1.msra.mxu0 0.0
  %446 = vmatprep.subr.mxu0 0.0
  %447 = vmatpush1.msra.mxu0 0.0
  %448 = vmatprep.subr.mxu0 0.0
  %449 = vmatpush1.msra.mxu0 0.0
  %450 = vmatprep.subr.mxu0 0.0
  %451 = vmatpush1.msra.mxu0 0.0
  %452 = vmatprep.subr.mxu0 0.0
  %453 = vmatpush1.msra.mxu0 0.0
  %454 = vmatprep.subr.mxu0 0.0
  %455 = vmatpush1.msra.mxu0 0.0
  %456 = vmatprep.subr.mxu0 0.0
  %457 = vmatpush1.msra.mxu0 0.0
  %458 = vmatprep.subr.mxu0 0.0
  %459 = vmatpush1.msra.mxu0 0.0
  %460 = vmatprep.subr.mxu0 0.0
  %461 = vmatpush1.msra.mxu0 0.0
  %462 = vmatprep.subr.mxu0 0.0
  %463 = vmatpush1.msra.mxu0 0.0
  %464 = vmatprep.subr.mxu0 0.0
  %465 = vmatpush1.msra.mxu0 0.0
  %466 = vmatprep.subr.mxu0 0.0
  %467 = vmatpush1.msra.mxu0 0.0
  %468 = vmatprep.subr.mxu0 0.0
  %469 = vmatpush1.msra.mxu0 0.0
  %470 = vmatprep.subr.mxu0 0.0
  %471 = vmatpush1.msra.mxu0 0.0
  %472 = vmatprep.subr.mxu0 0.0
  %473 = vmatpush1.msra.mxu0 0.0
  %474 = vmatprep.subr.mxu0 0.0
  %475 = vmatpush1.msra.mxu0 0.0
  %476 = vmatprep.subr.mxu0 0.0
  %477 = vmatpush1.msra.mxu0 0.0
  %478 = vmatprep.subr.mxu0 0.0
  %479 = vmatpush1.msra.mxu0 0.0
  %480 = vmatprep.subr.mxu0 0.0
  %481 = vmatpush1.msra.mxu0 0.0
  %482 = vmatprep.subr.mxu0 0.0
  %483 = vmatpush1.msra.mxu0 0.0
  %484 = vmatprep.subr.mxu0 0.0
  %485 = vmatpush1.msra.mxu0 0.0
  %486 = vmatprep.subr.mxu0 0.0
  %487 = vmatpush1.msra.mxu0 0.0
  %488 = vmatprep.subr.mxu0 0.0
  %489 = vmatpush1.msra.mxu0 0.0
  %490 = vmatprep.subr.mxu0 0.0
  %491 = vmatpush1.msra.mxu0 0.0
  %492 = vmatprep.mubr.f32.mxu0 0.0
  %493 = vmatmul.mubr.f32.gmra.mrb[0].mxu0 %v381
  %v494 = vpop.f32.mrb[0].mxu0
  %v495 = vadd.f32 0.0, %v494
  %v496 = vpop.f32.mrb[0].mxu0
  %497 = vmatprep.mubr.f32.mxu0 0.0
  %498 = vmatmul.mubr.f32.gmra.mrb[0].mxu0 %v384
  %v499 = vpop.f32.mrb[0].mxu0
  %v500 = vadd.f32 0.0, %v499
  %v501 = vpop.f32.mrb[0].mxu0
  %502 = vmatprep.mubr.f32.mxu0 0.0
  %503 = vmatmul.mubr.f32.gmra.mrb[0].mxu0 %v387
  %v504 = vpop.f32.mrb[0].mxu0
  %v505 = vadd.f32 0.0, %v504
  %v506 = vpop.f32.mrb[0].mxu0
  %507 = vmatprep.mubr.f32.mxu0 0.0
  %508 = vmatmul.mubr.f32.gmra.mrb[0].mxu0 %v390
  %v509 = vpop.f32.mrb[0].mxu0
  %v510 = vadd.f32 0.0, %v509
  %v511 = vpop.f32.mrb[0].mxu0
  %512 = vmatprep.mubr.f32.mxu0 0.0
  %513 = vmatmul.mubr.f32.gmra.mrb[0].mxu0 %v393
  %v514 = vpop.f32.mrb[0].mxu0
  %v515 = vadd.f32 0.0, %v514
  %v516 = vpop.f32.mrb[0].mxu0
  %517 = vmatprep.mubr.f32.mxu0 0.0
  %518 = vmatmul.mubr.f32.gmra.mrb[0].mxu0 %v396
  %v519 = vpop.f32.mrb[0].mxu0
  %v520 = vadd.f32 0.0, %v519
  %v521 = vpop.f32.mrb[0].mxu0
  %522 = vmatprep.mubr.f32.mxu0 0.0
  %523 = vmatmul.mubr.f32.gmra.mrb[0].mxu0 %v399
  %v524 = vpop.f32.mrb[0].mxu0
  %v525 = vadd.f32 0.0, %v524
  %v526 = vpop.f32.mrb[0].mxu0
  %527 = vmatprep.mubr.f32.mxu0 0.0
  %528 = vmatmul.mubr.f32.gmra.mrb[0].mxu0 %v402
  %v529 = vpop.f32.mrb[0].mxu0
  %v530 = vadd.f32 0.0, %v529
  %v531 = vpop.f32.mrb[0].mxu0
  %532 = vmatprep.mubr.f32.mxu0 0.0
  %533 = vmatmul.mubr.f32.gmra.mrb[0].mxu0 %v405
  %v534 = vpop.f32.mrb[0].mxu0
  %v535 = vadd.f32 0.0, %v534
  %v536 = vpop.f32.mrb[0].mxu0
  %537 = vmatprep.mubr.f32.mxu0 0.0
  %538 = vmatmul.mubr.f32.gmra.mrb[0].mxu0 %v408
  %v539 = vpop.f32.mrb[0].mxu0
  %v540 = vadd.f32 0.0, %v539
  %v541 = vpop.f32.mrb[0].mxu0
  %542 = vmatprep.mubr.f32.mxu0 0.0
  %543 = vmatmul.mubr.f32.gmra.mrb[0].mxu0 %v411
  %v544 = vpop.f32.mrb[0].mxu0
  %v545 = vadd.f32 0.0, %v544
  %v546 = vpop.f32.mrb[0].mxu0
  %547 = vmatprep.mubr.f32.mxu0 0.0
  %548 = vmatmul.mubr.f32.gmra.mrb[0].mxu0 %v414
  %v549 = vpop.f32.mrb[0].mxu0
  %v550 = vadd.f32 0.0, %v549
  %v551 = vpop.f32.mrb[0].mxu0
  %552 = vmatprep.mubr.f32.mxu0 0.0
  %553 = vmatmul.mubr.f32.gmra.mrb[0].mxu0 %v417
  %v554 = vpop.f32.mrb[0].mxu0
  %v555 = vadd.f32 0.0, %v554
  %v556 = vpop.f32.mrb[0].mxu0
  %557 = vmatprep.mubr.f32.mxu0 0.0
  %558 = vmatmul.mubr.f32.gmra.mrb[0].mxu0 %v420
  %v559 = vpop.f32.mrb[0].mxu0
  %v560 = vadd.f32 0.0, %v559
  %v561 = vpop.f32.mrb[0].mxu0
  %562 = vmatprep.mubr.f32.mxu0 0.0
  %563 = vmatmul.mubr.f32.gmra.mrb[0].mxu0 %v423
  %v564 = vpop.f32.mrb[0].mxu0
  %v565 = vadd.f32 0.0, %v564
  %v566 = vpop.f32.mrb[0].mxu0
  %567 = vmatprep.mubr.f32.mxu0 0.0
  %568 = vmatmul.mubr.f32.gmra.mrb[0].mxu0 %v426
  %v569 = vpop.f32.mrb[0].mxu0
  %v570 = vadd.f32 0.0, %v569
  %v571 = vpop.f32.mrb[0].mxu0
  %572 = vdwg.mxu0
  %v573 = vlaneseq
  %v574 = vshrl.u32 %v573, 7
  %v575 = vsub.s32 0, %v574
  %v576 = vrot.slane %v18, %v575
  %v577 = vmul.f32 %v495, %v576
  %v578 = vmul.f32 %v500, %v576
  %v579 = vlaneseq
  %v580 = vshrl.u32 %v579, 7
  %v581 = vsub.s32 1, %v580
  %v582 = vrot.slane %v18, %v581
  %v583 = vmul.f32 %v505, %v582
  %v584 = vmul.f32 %v510, %v582
  %v585 = vadd.f32 %v577, %v583
  %v586 = vadd.f32 %v578, %v584
  %v587 = vlaneseq
  %v588 = vshrl.u32 %v587, 7
  %v589 = vsub.s32 2, %v588
  %v590 = vrot.slane %v18, %v589
  %v591 = vmul.f32 %v515, %v590
  %v592 = vmul.f32 %v520, %v590
  %v593 = vadd.f32 %v585, %v591
  %v594 = vadd.f32 %v586, %v592
  %v595 = vlaneseq
  %v596 = vshrl.u32 %v595, 7
  %v597 = vsub.s32 3, %v596
  %v598 = vrot.slane %v18, %v597
  %v599 = vmul.f32 %v525, %v598
  %v600 = vmul.f32 %v530, %v598
  %v601 = vadd.f32 %v593, %v599
  %v602 = vadd.f32 %v594, %v600
  %v603 = vlaneseq
  %v604 = vshrl.u32 %v603, 7
  %v605 = vsub.s32 4, %v604
  %v606 = vrot.slane %v18, %v605
  %v607 = vmul.f32 %v535, %v606
  %v608 = vmul.f32 %v540, %v606
  %v609 = vadd.f32 %v601, %v607
  %v610 = vadd.f32 %v602, %v608
  %v611 = vlaneseq
  %v612 = vshrl.u32 %v611, 7
  %v613 = vsub.s32 5, %v612
  %v614 = vrot.slane %v18, %v613
  %v615 = vmul.f32 %v545, %v614
  %v616 = vmul.f32 %v550, %v614
  %v617 = vadd.f32 %v609, %v615
  %v618 = vadd.f32 %v610, %v616
  %v619 = vlaneseq
  %v620 = vshrl.u32 %v619, 7
  %v621 = vsub.s32 6, %v620
  %v622 = vrot.slane %v18, %v621
  %v623 = vmul.f32 %v555, %v622
  %v624 = vmul.f32 %v560, %v622
  %v625 = vadd.f32 %v617, %v623
  %v626 = vadd.f32 %v618, %v624
  %v627 = vlaneseq
  %v628 = vshrl.u32 %v627, 7
  %v629 = vsub.s32 7, %v628
  %v630 = vrot.slane %v18, %v629
  %v631 = vmul.f32 %v565, %v630
  %v632 = vmul.f32 %v570, %v630
  %v633 = vadd.f32 %v625, %v631
  %v634 = vadd.f32 %v626, %v632
  %v635 = vlaneseq
  %v636 = vshrl.u32 %v635, 7
  %v637 = vsub.s32 6, %v636
  %v638 = vrot.slane %v20, %v637
  %v639 = vadd.f32 %v633, %v638
  %v640 = vadd.f32 %v634, %v638
  %v641 = vld [vmem:[%s3] sm:$0xff]
  %v642 = vld [vmem:[%s3 + $0x8] sm:$0xff]
  %v643 = vld [vmem:[%s3 + $0x10] sm:$0xff]
  %v644 = vld [vmem:[%s3 + $0x18] sm:$0xff]
  %v645 = vld [vmem:[%s3 + $0x20] sm:$0xff]
  %v646 = vld [vmem:[%s3 + $0x28] sm:$0xff]
  %v647 = vld [vmem:[%s3 + $0x30] sm:$0xff]
  %v648 = vld [vmem:[%s3 + $0x38] sm:$0xff]
  %v649 = vld [vmem:[%s3 + $0x40] sm:$0xff]
  %v650 = vld [vmem:[%s3 + $0x48] sm:$0xff]
  %v651 = vld [vmem:[%s3 + $0x50] sm:$0xff]
  %v652 = vld [vmem:[%s3 + $0x58] sm:$0xff]
  %v653 = vld [vmem:[%s3 + $0x60] sm:$0xff]
  %v654 = vld [vmem:[%s3 + $0x68] sm:$0xff]
  %v655 = vld [vmem:[%s3 + $0x70] sm:$0xff]
  %v656 = vld [vmem:[%s3 + $0x78] sm:$0xff]
  %v657 = vlaneseq
  %v658 = vshrl.u32 %v657, 7
  %v659 = vsub.s32 7, %v658
  %v660 = vrot.slane %v20, %v659
  %661 = vmatprep.subr.mxu0 0.0
  %662 = vmatpush1.msra.mxu0 %v641
  %663 = vmatprep.subr.mxu0 0.0
  %664 = vmatpush1.msra.mxu0 %v642
  %665 = vmatprep.subr.mxu0 0.0
  %666 = vmatpush1.msra.mxu0 %v643
  %667 = vmatprep.subr.mxu0 0.0
  %668 = vmatpush1.msra.mxu0 %v644
  %669 = vmatprep.subr.mxu0 0.0
  %670 = vmatpush1.msra.mxu0 %v645
  %671 = vmatprep.subr.mxu0 0.0
  %672 = vmatpush1.msra.mxu0 %v646
  %673 = vmatprep.subr.mxu0 0.0
  %674 = vmatpush1.msra.mxu0 %v647
  %675 = vmatprep.subr.mxu0 0.0
  %676 = vmatpush1.msra.mxu0 %v648
  %677 = vmatprep.subr.mxu0 0.0
  %678 = vmatpush1.msra.mxu0 %v649
  %679 = vmatprep.subr.mxu0 0.0
  %680 = vmatpush1.msra.mxu0 %v650
  %681 = vmatprep.subr.mxu0 0.0
  %682 = vmatpush1.msra.mxu0 %v651
  %683 = vmatprep.subr.mxu0 0.0
  %684 = vmatpush1.msra.mxu0 %v652
  %685 = vmatprep.subr.mxu0 0.0
  %686 = vmatpush1.msra.mxu0 %v653
  %687 = vmatprep.subr.mxu0 0.0
  %688 = vmatpush1.msra.mxu0 %v654
  %689 = vmatprep.subr.mxu0 0.0
  %690 = vmatpush1.msra.mxu0 %v655
  %691 = vmatprep.subr.mxu0 0.0
  %692 = vmatpush1.msra.mxu0 %v656
  %693 = vmatprep.subr.mxu0 0.0
  %694 = vmatpush1.msra.mxu0 0.0
  %695 = vmatprep.subr.mxu0 0.0
  %696 = vmatpush1.msra.mxu0 0.0
  %697 = vmatprep.subr.mxu0 0.0
  %698 = vmatpush1.msra.mxu0 0.0
  %699 = vmatprep.subr.mxu0 0.0
  %700 = vmatpush1.msra.mxu0 0.0
  %701 = vmatprep.subr.mxu0 0.0
  %702 = vmatpush1.msra.mxu0 0.0
  %703 = vmatprep.subr.mxu0 0.0
  %704 = vmatpush1.msra.mxu0 0.0
  %705 = vmatprep.subr.mxu0 0.0
  %706 = vmatpush1.msra.mxu0 0.0
  %707 = vmatprep.subr.mxu0 0.0
  %708 = vmatpush1.msra.mxu0 0.0
  %709 = vmatprep.subr.mxu0 0.0
  %710 = vmatpush1.msra.mxu0 0.0
  %711 = vmatprep.subr.mxu0 0.0
  %712 = vmatpush1.msra.mxu0 0.0
  %713 = vmatprep.subr.mxu0 0.0
  %714 = vmatpush1.msra.mxu0 0.0
  %715 = vmatprep.subr.mxu0 0.0
  %716 = vmatpush1.msra.mxu0 0.0
  %717 = vmatprep.subr.mxu0 0.0
  %718 = vmatpush1.msra.mxu0 0.0
  %719 = vmatprep.subr.mxu0 0.0
  %720 = vmatpush1.msra.mxu0 0.0
  %721 = vmatprep.subr.mxu0 0.0
  %722 = vmatpush1.msra.mxu0 0.0
  %723 = vmatprep.subr.mxu0 0.0
  %724 = vmatpush1.msra.mxu0 0.0
  %725 = vmatprep.mubr.f32.mxu0 0.0
  %726 = vmatmul.mubr.f32.gmra.mrb[0].mxu0 %v639
  %v727 = vpop.f32.mrb[0].mxu0
  %v728 = vadd.f32 %v660, %v727
  %v729 = vpop.f32.mrb[0].mxu0
  %730 = vmatprep.mubr.f32.mxu0 0.0
  %731 = vmatmul.mubr.f32.gmra.mrb[0].mxu0 %v640
  %v732 = vpop.f32.mrb[0].mxu0
  %v733 = vadd.f32 %v660, %v732
  %v734 = vpop.f32.mrb[0].mxu0
  %735 = vdwg.mxu0
  %v736 = vmul.f32 %v728, %v19
  %vm737 = vcmask 523264
  %v738 = vsel %vm737, %v736, 0.0
  %v739 = vrot.slane %v738, 4
  %v740 = vadd.f32 %v738, %v739
  %v741 = vrot.slane %v740, 2
  %v742 = vadd.f32 %v740, %v741
  %v743 = vrot.slane %v742, 1
  %v744 = vadd.f32 %v742, %v743
  %v745 = vmul.f32 %v733, %v19
  %v746 = vsel %vm737, %v745, 0.0
  %v747 = vrot.slane %v746, 4
  %v748 = vadd.f32 %v746, %v747
  %v749 = vrot.slane %v748, 2
  %v750 = vadd.f32 %v748, %v749
  %v751 = vrot.slane %v750, 1
  %v752 = vadd.f32 %v750, %v751
  %vm753 = vcmask 1040384
  %v754 = vsel %vm753, %v744, %v752
  %v755 = vlaneseq
  %v756 = vshrl.u32 %v755, 7
  %v757 = vsub.s32 0, %v756
  %v758 = vrot.slane %v21, %v757
  %v759 = vadd.f32 %v754, %v758
  %v760 = vlaneseq
  %v761 = vshrl.u32 %v760, 7
  %v762 = vsub.s32 1, %v761
  %v763 = vrot.slane %v21, %v762
  %v764 = vmul.f32 %v759, %v763
  %vm765 = vcmask 517120
  %v766 = vsel %vm765, %v764, 0.0
  %767 = vadd.xlane.f32.xlu0 %v766
  %v768 = vpop.xlane.xlu0 %767
  %v769 = vlaneseq
  %v770 = vshrl.u32 %v769, 7
  %v771 = vsub.s32 2, %v770
  %v772 = vrot.slane %v21, %v771
  %v773 = vadd.f32 %v768, %v772
  %v774 = vsub.f32 0.0, %v773
  %v775 = vmul.f32 %v774, 1.442695
  %v776 = vpow.pop %v775
  %v777 = vadd.f32 %v776, 1.0
  %v778 = vrcp.pop %v777
  %v779 = vmul.f32 1.0, %v778
  %vm780 = vcmask 1024
  %781 = vst.msk [vmem:[%s4] sm:$0x3] %vm780, %v779
  // Predicated region
  $region18: #{tpu_custom_call.1} parent=0 // pred_check
    _
  $region19: #{tpu_custom_call.1} parent=0 // pred_check_branch
    %783 = sbr.rel (0) target = $region21
  $region20: #{tpu_custom_call.1} parent=0 // pred_region
    _
  $region21: #{tpu_custom_call.1} parent=0 // pred_fallthru
    _
  // Predicated region
  $region22: #{tpu_custom_call.1} parent=0 // pred_check
    _
  $region23: #{tpu_custom_call.1} parent=0 // pred_check_branch
    %785 = sbr.rel (0) target = $region25
  $region24: #{tpu_custom_call.1} parent=0 // pred_region
    _
  $region25: #{tpu_custom_call.1} parent=0 // pred_fallthru
    _

</llo_original>
